<compile_context>
chip_gen: v7x
topology: tpu7x:2x2x1
jax: 0.10.0
libtpu: 0.0.40
codegen_flags: <defaults>
</compile_context>

<pallas_src>
import jax
import jax.numpy as jnp
from jax import lax
from jax.experimental import pallas as pl
from jax.experimental.pallas import tpu as pltpu


def _make_kernel(cb, n_chunks):
    """Build the kernel for a static (chunk_size, num_chunks) configuration."""

    def mlp_kernel(x_ref, w1T_ref, b1_ref, w2_ref, b2_ref, outT_ref):
        # x_ref: [tb, D] streamed; w1T: [H, D], b1: [H, 1], w2: [H, 1] resident VMEM;
        # b2: [1] SMEM scalar; outT: [1, tb] lane-dense output.
        w1T = w1T_ref[...]
        b1 = b1_ref[...]
        w2 = w2_ref[...]
        b2 = b2_ref[0]

        def compute_chunk(off):
            xc = x_ref[pl.ds(off, cb), :]                                 # [cb, D]
            # hT = W1^T @ xc^T : contract D-with-D (A @ B^T); no materialized transpose,
            # batch lands on lanes so every downstream vreg is lane-dense.
            hT = lax.dot_general(w1T, xc, (((1,), (1,)), ((), ())),
                                 preferred_element_type=jnp.float32)      # [H, cb]
            hT = jnp.tanh(hT + b1)
            # out_features == 1: VPU mul + XLU sublane reduce (an N=1 matmul would waste
            # >99% of the MXU result tile and sequential MRF pops on v5e/v6e).
            z = jnp.sum(hT * w2, axis=0, keepdims=True) + b2              # [1, cb]
            # sigmoid(z) = 0.5 * (1 + tanh(z / 2)): one EUP transcendental.
            outT_ref[:, pl.ds(off, cb)] = (0.5 * (jnp.tanh(0.5 * z) + 1.0)).astype(
                outT_ref.dtype)

        if n_chunks == 1:
            compute_chunk(0)
        else:
            def body(c, carry):
                compute_chunk(pl.multiple_of(c * cb, cb))
                return carry
            lax.fori_loop(0, n_chunks, body, 0, unroll=min(n_chunks, 8))

    return mlp_kernel


def simple_neural_net(x, w1, b1, w2, b2, *, batch_tile=32768, batch_chunk=1024):
    """x: [B, D]; w1: [D, H]; b1: [1, H]; w2: [H, 1]; b2: [1, 1]. Returns [B, 1]."""
    B, D = x.shape
    H = w1.shape[1]

    # Streamed-x tile: keep it big (MiB scale) to amortize per-grid-step overhead, but
    # bounded so double-buffered blocks fit every generation's scoped-VMEM default
    # (v7x has only 64 MiB physical / 32 MiB scoped -- tb=32768 is safe everywhere).
    tb = batch_tile if B > batch_tile else B
    n_tiles = pl.cdiv(B, tb)                     # partial last block handled by Pallas

    # In-kernel chunking of the batch (lane) axis: bounds vreg live ranges and avoids
    # materializing the full [H, tb] f32 intermediate.
    cb = tb
    for cand in (batch_chunk, 512, 256, 128):
        if tb % cand == 0:
            cb = cand
            break
    n_chunks = tb // cb

    # Tiny resident operands; layout plumbing only (32x16 / 32x1 -- negligible).
    w1T = w1.T                                   # [H, D]
    b1c = jnp.reshape(b1, (H, 1))                # [H, 1]
    b2s = jnp.reshape(b2, (1,)).astype(jnp.float32)   # 1-D SMEM scalar (tiny padding)

    kernel = _make_kernel(cb, n_chunks)

    x_item = jnp.dtype(x.dtype).itemsize
    w_item = jnp.dtype(w1.dtype).itemsize
    cost = pl.CostEstimate(
        flops=2 * B * D * H + 2 * B * H,
        transcendentals=B * (H + 1),
        bytes_accessed=B * D * x_item + B * x_item + (H * D + 2 * H) * w_item + 4,
    )

    def build(*, core_parallel, single_buffer_resident):
        res_kw = {"pipeline_mode": pl.Buffered(1)} if single_buffer_resident else {}
        batch_sem = pltpu.CORE_PARALLEL if core_parallel else "parallel"
        return pl.pallas_call(
            kernel,
            out_shape=jax.ShapeDtypeStruct((1, B), x.dtype),
            grid=(n_tiles,),
            in_specs=[
                pl.BlockSpec((tb, D), lambda i: (i, 0)),                # streamed x (natural layout)
                pl.BlockSpec((H, D), lambda i: (0, 0), **res_kw),       # resident W1^T
                pl.BlockSpec((H, 1), lambda i: (0, 0), **res_kw),       # resident b1
                pl.BlockSpec((H, 1), lambda i: (0, 0), **res_kw),       # resident w2
                pl.BlockSpec(memory_space=pltpu.MemorySpace.SMEM),      # b2 scalar
            ],
            out_specs=pl.BlockSpec((1, tb), lambda i: (0, i)),          # lane-dense output
            compiler_params=pltpu.CompilerParams(
                dimension_semantics=(batch_sem,),
            ),
            cost_estimate=cost,
        )

    args = (x, w1T, b1c, w2, b2s)
    try:
        # Preferred: shard batch tiles across v7x's two TensorCores; single-buffer the
        # tiny resident weight tiles.  Harmless on single-TC v5e/v6e.
        outT = build(core_parallel=True, single_buffer_resident=True)(*args)
    except Exception:
        # Conservative fallback for runtimes that reject CORE_PARALLEL / Buffered(1).
        outT = build(core_parallel=False, single_buffer_resident=False)(*args)

    # (1, B) -> (B, 1) is a pure row-major reshape: no data movement.
    return outT.reshape(B, 1)


def reference(x, w1, b1, w2, b2):
    h = jnp.tanh(x.astype(jnp.float32) @ w1.astype(jnp.float32) + b1)
    return jax.nn.sigmoid(h @ w2 + b2)


if __name__ == "__main__":
    key = jax.random.PRNGKey(0)
    batch, input_size, hidden_size = 8, 16, 32

    k_x, k_w1, k_b1, k_w2, k_b2, k_x2 = jax.random.split(key, 6)
    x = jax.random.normal(k_x, (batch, input_size), dtype=jnp.float32)

    # Deterministic param init (mimicking nn.Linear's uniform(-1/sqrt(fan_in), 1/sqrt(fan_in)))
    bound1 = 1.0 / jnp.sqrt(input_size)
    w1 = jax.random.uniform(k_w1, (input_size, hidden_size), jnp.float32, -bound1, bound1)
    b1 = jax.random.uniform(k_b1, (1, hidden_size), jnp.float32, -bound1, bound1)
    bound2 = 1.0 / jnp.sqrt(hidden_size)
    w2 = jax.random.uniform(k_w2, (hidden_size, 1), jnp.float32, -bound2, bound2)
    b2 = jax.random.uniform(k_b2, (1, 1), jnp.float32, -bound2, bound2)

    # f32 path at the module's small shapes: exact match to the PyTorch semantics.
    out = simple_neural_net(x, w1, b1, w2, b2)
    jax.block_until_ready(out)
    ref = reference(x, w1, b1, w2, b2)
    assert out.shape == (batch, 1), out.shape
    assert jnp.allclose(out, ref, atol=1e-5, rtol=1e-5), "f32 mismatch vs reference"

    # Multi-tile + multi-chunk + partial-last-block path (small overrides to keep it quick).
    x2 = jax.random.normal(k_x2, (600, input_size), dtype=jnp.float32)
    out2 = simple_neural_net(x2, w1, b1, w2, b2, batch_tile=256, batch_chunk=128)
    jax.block_until_ready(out2)
    ref2 = reference(x2, w1, b1, w2, b2)
    assert out2.shape == (600, 1), out2.shape
    assert jnp.allclose(out2, ref2, atol=1e-5, rtol=1e-5), "tiled f32 mismatch vs reference"

    # Optional bf16-streamed activations/weights (halves the dominant HBM stream on big B);
    # accumulation stays f32 in-kernel, so the tolerance only absorbs input/output rounding.
    out_bf16 = simple_neural_net(x.astype(jnp.bfloat16), w1.astype(jnp.bfloat16), b1, w2, b2)
    jax.block_until_ready(out_bf16)
    assert jnp.allclose(out_bf16.astype(jnp.float32), ref, atol=2e-2, rtol=2e-2), \
        "bf16 mismatch vs reference"

    print("KERNEL_OK")
</pallas_src>

<mosaic_0001>
module attributes {stable_mosaic.version = 11 : i64} {
  func.func @mlp_kernel(%arg0: i32, %arg1: memref<8x16xf32, #tpu.memory_space<vmem>>, %arg2: memref<32x16xf32, #tpu.memory_space<vmem>>, %arg3: memref<32x1xf32, #tpu.memory_space<vmem>>, %arg4: memref<32x1xf32, #tpu.memory_space<vmem>>, %arg5: memref<1xf32, #tpu.memory_space<smem>>, %arg6: memref<1x8xf32, #tpu.memory_space<vmem>>) attributes {dimension_semantics = [#tpu.dimension_semantics<core_parallel>], iteration_bounds = array<i64: 1>, scalar_prefetch = 0 : i64, scratch_operands = 0 : i64, tpu.core_type = #tpu.core_type<tc>, window_params = [{transform_indices = @transform_0, window_bounds = array<i64: 8, 16>}, {pipeline_mode = #tpu.pipeline_mode<synchronous>, transform_indices = @transform_1, window_bounds = array<i64: 32, 16>}, {pipeline_mode = #tpu.pipeline_mode<synchronous>, transform_indices = @transform_2, window_bounds = array<i64: 32, 1>}, {pipeline_mode = #tpu.pipeline_mode<synchronous>, transform_indices = @transform_3, window_bounds = array<i64: 32, 1>}, {transform_indices = @transform_4, window_bounds = array<i64: 1>}, {transform_indices = @transform_5, window_bounds = array<i64: 1, 8>}]} {
    %c0 = arith.constant 0 : index
    %c0_0 = arith.constant 0 : index
    %0 = vector.load %arg2[%c0, %c0_0] : memref<32x16xf32, #tpu.memory_space<vmem>>, vector<32x16xf32>
    %c0_1 = arith.constant 0 : index
    %c0_2 = arith.constant 0 : index
    %1 = vector.load %arg3[%c0_1, %c0_2] : memref<32x1xf32, #tpu.memory_space<vmem>>, vector<32x1xf32>
    %c0_3 = arith.constant 0 : index
    %c0_4 = arith.constant 0 : index
    %2 = vector.load %arg4[%c0_3, %c0_4] : memref<32x1xf32, #tpu.memory_space<vmem>>, vector<32x1xf32>
    %c0_5 = arith.constant 0 : index
    %3 = memref.load %arg5[%c0_5] : memref<1xf32, #tpu.memory_space<smem>>
    %c0_6 = arith.constant 0 : index
    %c0_7 = arith.constant 0 : index
    %4 = vector.load %arg1[%c0_6, %c0_7] : memref<8x16xf32, #tpu.memory_space<vmem>>, vector<8x16xf32>
    %cst = arith.constant dense<0.000000e+00> : vector<32x8xf32>
    %5 = tpu.matmul %0, %4, %cst {dimension_numbers = #tpu.dot_dimension_numbers<[1], [1], [0], [0], [0, 0, 1, 0], [], []>} : vector<32x16xf32>, vector<8x16xf32>, vector<32x8xf32> -> vector<32x8xf32>
    %6 = vector.broadcast %1 : vector<32x1xf32> to vector<32x8xf32>
    %7 = arith.addf %5, %6 : vector<32x8xf32>
    %8 = math.tanh %7 : vector<32x8xf32>
    %9 = vector.broadcast %2 : vector<32x1xf32> to vector<32x8xf32>
    %10 = arith.mulf %8, %9 : vector<32x8xf32>
    %cst_8 = arith.constant dense<0.000000e+00> : vector<8xf32>
    %11 = vector.multi_reduction <add>, %10, %cst_8 [0] : vector<32x8xf32> to vector<8xf32>
    %12 = vector.shape_cast %11 : vector<8xf32> to vector<1x8xf32>
    %13 = vector.broadcast %3 : f32 to vector<1x8xf32>
    %14 = arith.addf %12, %13 : vector<1x8xf32>
    %cst_9 = arith.constant 5.000000e-01 : f32
    %15 = vector.broadcast %cst_9 : f32 to vector<1x8xf32>
    %16 = arith.mulf %15, %14 : vector<1x8xf32>
    %17 = math.tanh %16 : vector<1x8xf32>
    %cst_10 = arith.constant 1.000000e+00 : f32
    %18 = vector.broadcast %cst_10 : f32 to vector<1x8xf32>
    %19 = arith.addf %17, %18 : vector<1x8xf32>
    %cst_11 = arith.constant 5.000000e-01 : f32
    %20 = vector.broadcast %cst_11 : f32 to vector<1x8xf32>
    %21 = arith.mulf %20, %19 : vector<1x8xf32>
    %c0_12 = arith.constant 0 : index
    %c0_13 = arith.constant 0 : index
    %22 = vector.load %arg6[%c0_12, %c0_13] : memref<1x8xf32, #tpu.memory_space<vmem>>, vector<1x8xf32>
    tpu.vector_store %arg6[%c0_12, %c0_13], %21 {strides = array<i32>} : memref<1x8xf32, #tpu.memory_space<vmem>>, vector<1x8xf32>,
    return
  }
  func.func @transform_0(%arg0: i32) -> (i32, i32) {
    %c0_i32 = arith.constant 0 : i32
    %c0_i32_0 = arith.constant 0 : i32
    return %arg0, %c0_i32 : i32, i32
  }
  func.func @transform_1(%arg0: i32) -> (i32, i32) {
    %c0_i32 = arith.constant 0 : i32
    %c0_i32_0 = arith.constant 0 : i32
    %c0_i32_1 = arith.constant 0 : i32
    return %c0_i32, %c0_i32_0 : i32, i32
  }
  func.func @transform_2(%arg0: i32) -> (i32, i32) {
    %c0_i32 = arith.constant 0 : i32
    %c0_i32_0 = arith.constant 0 : i32
    %c0_i32_1 = arith.constant 0 : i32
    return %c0_i32, %c0_i32_0 : i32, i32
  }
  func.func @transform_3(%arg0: i32) -> (i32, i32) {
    %c0_i32 = arith.constant 0 : i32
    %c0_i32_0 = arith.constant 0 : i32
    %c0_i32_1 = arith.constant 0 : i32
    return %c0_i32, %c0_i32_0 : i32, i32
  }
  func.func @transform_4(%arg0: i32) -> i32 {
    %c0_i32 = arith.constant 0 : i32
    %c0_i32_0 = arith.constant 0 : i32
    return %c0_i32 : i32
  }
  func.func @transform_5(%arg0: i32) -> (i32, i32) {
    %c0_i32 = arith.constant 0 : i32
    %c0_i32_0 = arith.constant 0 : i32
    return %c0_i32, %arg0 : i32, i32
  }
}

module attributes {stable_mosaic.version = 11 : i64} {
  func.func @mlp_kernel(%arg0: i32, %arg1: memref<8x16xf32, #tpu.memory_space<vmem>>, %arg2: memref<32x16xf32, #tpu.memory_space<vmem>>, %arg3: memref<32x1xf32, #tpu.memory_space<vmem>>, %arg4: memref<32x1xf32, #tpu.memory_space<vmem>>, %arg5: memref<1xf32, #tpu.memory_space<smem>>, %arg6: memref<1x8xf32, #tpu.memory_space<vmem>>) attributes {dimension_semantics = [#tpu.dimension_semantics<parallel>], iteration_bounds = array<i64: 1>, scalar_prefetch = 0 : i64, scratch_operands = 0 : i64, tpu.core_type = #tpu.core_type<tc>, window_params = [{transform_indices = @transform_0, window_bounds = array<i64: 8, 16>}, {pipeline_mode = #tpu.pipeline_mode<synchronous>, transform_indices = @transform_1, window_bounds = array<i64: 32, 16>}, {pipeline_mode = #tpu.pipeline_mode<synchronous>, transform_indices = @transform_2, window_bounds = array<i64: 32, 1>}, {pipeline_mode = #tpu.pipeline_mode<synchronous>, transform_indices = @transform_3, window_bounds = array<i64: 32, 1>}, {transform_indices = @transform_4, window_bounds = array<i64: 1>}, {transform_indices = @transform_5, window_bounds = array<i64: 1, 8>}]} {
    %c0 = arith.constant 0 : index
    %c0_0 = arith.constant 0 : index
    %0 = vector.load %arg2[%c0, %c0_0] : memref<32x16xf32, #tpu.memory_space<vmem>>, vector<32x16xf32>
    %c0_1 = arith.constant 0 : index
    %c0_2 = arith.constant 0 : index
    %1 = vector.load %arg3[%c0_1, %c0_2] : memref<32x1xf32, #tpu.memory_space<vmem>>, vector<32x1xf32>
    %c0_3 = arith.constant 0 : index
    %c0_4 = arith.constant 0 : index
    %2 = vector.load %arg4[%c0_3, %c0_4] : memref<32x1xf32, #tpu.memory_space<vmem>>, vector<32x1xf32>
    %c0_5 = arith.constant 0 : index
    %3 = memref.load %arg5[%c0_5] : memref<1xf32, #tpu.memory_space<smem>>
    %c0_6 = arith.constant 0 : index
    %c0_7 = arith.constant 0 : index
    %4 = vector.load %arg1[%c0_6, %c0_7] : memref<8x16xf32, #tpu.memory_space<vmem>>, vector<8x16xf32>
    %cst = arith.constant dense<0.000000e+00> : vector<32x8xf32>
    %5 = tpu.matmul %0, %4, %cst {dimension_numbers = #tpu.dot_dimension_numbers<[1], [1], [0], [0], [0, 0, 1, 0], [], []>} : vector<32x16xf32>, vector<8x16xf32>, vector<32x8xf32> -> vector<32x8xf32>
    %6 = vector.broadcast %1 : vector<32x1xf32> to vector<32x8xf32>
    %7 = arith.addf %5, %6 : vector<32x8xf32>
    %8 = math.tanh %7 : vector<32x8xf32>
    %9 = vector.broadcast %2 : vector<32x1xf32> to vector<32x8xf32>
    %10 = arith.mulf %8, %9 : vector<32x8xf32>
    %cst_8 = arith.constant dense<0.000000e+00> : vector<8xf32>
    %11 = vector.multi_reduction <add>, %10, %cst_8 [0] : vector<32x8xf32> to vector<8xf32>
    %12 = vector.shape_cast %11 : vector<8xf32> to vector<1x8xf32>
    %13 = vector.broadcast %3 : f32 to vector<1x8xf32>
    %14 = arith.addf %12, %13 : vector<1x8xf32>
    %cst_9 = arith.constant 5.000000e-01 : f32
    %15 = vector.broadcast %cst_9 : f32 to vector<1x8xf32>
    %16 = arith.mulf %15, %14 : vector<1x8xf32>
    %17 = math.tanh %16 : vector<1x8xf32>
    %cst_10 = arith.constant 1.000000e+00 : f32
    %18 = vector.broadcast %cst_10 : f32 to vector<1x8xf32>
    %19 = arith.addf %17, %18 : vector<1x8xf32>
    %cst_11 = arith.constant 5.000000e-01 : f32
    %20 = vector.broadcast %cst_11 : f32 to vector<1x8xf32>
    %21 = arith.mulf %20, %19 : vector<1x8xf32>
    %c0_12 = arith.constant 0 : index
    %c0_13 = arith.constant 0 : index
    %22 = vector.load %arg6[%c0_12, %c0_13] : memref<1x8xf32, #tpu.memory_space<vmem>>, vector<1x8xf32>
    tpu.vector_store %arg6[%c0_12, %c0_13], %21 {strides = array<i32>} : memref<1x8xf32, #tpu.memory_space<vmem>>, vector<1x8xf32>,
    return
  }
  func.func @transform_0(%arg0: i32) -> (i32, i32) {
    %c0_i32 = arith.constant 0 : i32
    %c0_i32_0 = arith.constant 0 : i32
    return %arg0, %c0_i32 : i32, i32
  }
  func.func @transform_1(%arg0: i32) -> (i32, i32) {
    %c0_i32 = arith.constant 0 : i32
    %c0_i32_0 = arith.constant 0 : i32
    %c0_i32_1 = arith.constant 0 : i32
    return %c0_i32, %c0_i32_0 : i32, i32
  }
  func.func @transform_2(%arg0: i32) -> (i32, i32) {
    %c0_i32 = arith.constant 0 : i32
    %c0_i32_0 = arith.constant 0 : i32
    %c0_i32_1 = arith.constant 0 : i32
    return %c0_i32, %c0_i32_0 : i32, i32
  }
  func.func @transform_3(%arg0: i32) -> (i32, i32) {
    %c0_i32 = arith.constant 0 : i32
    %c0_i32_0 = arith.constant 0 : i32
    %c0_i32_1 = arith.constant 0 : i32
    return %c0_i32, %c0_i32_0 : i32, i32
  }
  func.func @transform_4(%arg0: i32) -> i32 {
    %c0_i32 = arith.constant 0 : i32
    %c0_i32_0 = arith.constant 0 : i32
    return %c0_i32 : i32
  }
  func.func @transform_5(%arg0: i32) -> (i32, i32) {
    %c0_i32 = arith.constant 0 : i32
    %c0_i32_0 = arith.constant 0 : i32
    return %c0_i32, %arg0 : i32, i32
  }
}

</mosaic_0001>

<llo_original>
// kernel: tpu_custom_call.1
$region0: #{tpu_custom_call.1}
  #allocation0 [shape = 'u32[]', space=smem, size = 0x4, offset = 0x4, fixed_abs, tag = 'smem constant byte address 0x4 - core index']
  #allocation1 [shape = 'u32[144,128]{1,0:T(1,128)}', space=vmem, size = 0x12000, scoped, tag = 'internal scratch']
  #allocation2 [shape = 'f32[1]{0:T(128)S(6)}', space=smem, size = 0x200, scoped, tag = 'scoped memory for tpu_custom_call.1']
  %s0 = inlined_call_operand.vmem [shape: f32[8,16], index: 0, kind: input, shape index: {}]
  %s1 = inlined_call_operand.vmem [shape: f32[32,16], index: 1, kind: input, shape index: {}]
  %s2 = inlined_call_operand.vmem [shape: f32[32,1], index: 2, kind: input, shape index: {}]
  %s3 = inlined_call_operand.vmem [shape: f32[32,1], index: 3, kind: input, shape index: {}]
  %s4 = inlined_call_operand.<no memory space> [shape: f32[1], index: 4, kind: input, shape index: {}]
  %s5 = inlined_call_operand.hbm [shape: f32[1,8], index: 5, kind: output, shape index: {}]
  %s6 = sld [smem:[#allocation0]]
  $region30: #{tpu_custom_call.1} parent=0
    _
  %s8 = ssub.s32 1, %s6
  %s9 = scalar_select 0, %s8, %s6
  %10 = sst [smem:[#allocation2]] %s4
  $region1: #{tpu_custom_call.1} parent=0
    #allocation3 [shape = 'u8[512]{0}', space=vmem, size = 0x400, scoped, tag = 'output window, operand 0, single buffered']
    #allocation4 [shape = 's32[1]{0}', space=sflag, size = 0x4, scoped, tag = 'scoped memory for tpu_custom_call.1']
    %11 = vsyncpa [#allocation4], 0
    // Predicated region
    $region2: #{tpu_custom_call.1} parent=1 // pred_check
      _
    $region3: #{tpu_custom_call.1} parent=1 // pred_check_branch
      %13 = sbr.rel (0) target = $region5
    $region4: #{tpu_custom_call.1} parent=1 // pred_region
      %p14 = scmp.lt.s32.totalorder %s9, 0
      %s15 = scalar_select %p14, %s9, 0
      %s16 = smul.addr %s15, 8
      %s17 = scalar_lea.vmem %s0, %s16
    $region5: #{tpu_custom_call.1} parent=1 // pred_fallthru
      _
    // Predicated region
    $region6: #{tpu_custom_call.1} parent=1 // pred_check
      _
    $region7: #{tpu_custom_call.1} parent=1 // pred_check_branch
      %19 = sbr.rel (0) target = $region9
    $region8: #{tpu_custom_call.1} parent=1 // pred_region
      _
    $region9: #{tpu_custom_call.1} parent=1 // pred_fallthru
      _
    // Predicated region
    $region10: #{tpu_custom_call.1} parent=1 // pred_check
      _
    $region11: #{tpu_custom_call.1} parent=1 // pred_check_branch
      %21 = sbr.rel (0) target = $region13
    $region12: #{tpu_custom_call.1} parent=1 // pred_region
      _
    $region13: #{tpu_custom_call.1} parent=1 // pred_fallthru
      _
    // Predicated region
    $region14: #{tpu_custom_call.1} parent=1 // pred_check
      _
    $region15: #{tpu_custom_call.1} parent=1 // pred_check_branch
      %23 = sbr.rel (0) target = $region17
    $region16: #{tpu_custom_call.1} parent=1 // pred_region
      _
    $region17: #{tpu_custom_call.1} parent=1 // pred_fallthru
      _
    // Predicated region
    $region18: #{tpu_custom_call.1} parent=1 // pred_check
      _
    $region19: #{tpu_custom_call.1} parent=1 // pred_check_branch
      %25 = sbr.rel (0) target = $region21
    $region20: #{tpu_custom_call.1} parent=1 // pred_region
      _
    $region21: #{tpu_custom_call.1} parent=1 // pred_fallthru
      _
    %p26 = scmp.lt.s32.totalorder %s9, 0
    %s27 = scalar_select %p26, %s9, 0
    %s28 = smul.addr %s27, 8
    %s29 = scalar_lea.vmem %s0, %s28
    %p30 = scmp.lt.s32.totalorder %s9, 0
    %s31 = scalar_select %p30, %s9, 0
    %s32 = smul.addr %s31, 8
    %s33 = scalar_lea.vmem %s0, %s32
    %v34 = vld [vmem:[%s1] sm:$0xff]
    %v35 = vld [vmem:[%s1 + $0x8] sm:$0xff]
    %v36 = vld [vmem:[%s1 + $0x10] sm:$0xff]
    %v37 = vld [vmem:[%s1 + $0x18] sm:$0xff]
    %v38 = vld [vmem:[%s2] sm:$0xff]
    %v39 = vld [vmem:[%s2 + $0x8] sm:$0xff]
    %v40 = vld [vmem:[%s2 + $0x10] sm:$0xff]
    %v41 = vld [vmem:[%s2 + $0x18] sm:$0xff]
    %v42 = vld [vmem:[%s3] sm:$0xff]
    %v43 = vld [vmem:[%s3 + $0x8] sm:$0xff]
    %v44 = vld [vmem:[%s3 + $0x10] sm:$0xff]
    %v45 = vld [vmem:[%s3 + $0x18] sm:$0xff]
    %s46 = sld [smem:[#allocation2]]
    %v47 = vld [vmem:[%s33] sm:$0xff]
    %49 = vset.pattern.permute.xlu0 0
    %50 = vperm.xlu0 %49, %v38
    %v51 = vpop.permute.xlu0 %50
    %54 = vset.pattern.permute.xlu0 0
    %55 = vperm.xlu0 %54, %v39
    %v56 = vpop.permute.xlu0 %55
    %59 = vset.pattern.permute.xlu0 0
    %60 = vperm.xlu0 %59, %v40
    %v61 = vpop.permute.xlu0 %60
    %64 = vset.pattern.permute.xlu0 0
    %65 = vperm.xlu0 %64, %v41
    %v66 = vpop.permute.xlu0 %65
    %vm68 = vcmask 130048
    %v70 = vsel %vm68, %v34, 0
    %v73 = vsel %vm68, %v35, 0
    %v76 = vsel %vm68, %v36, 0
    %v79 = vsel %vm68, %v37, 0
    %v82 = vsel %vm68, %v47, 0
    %84 = vmatprep.subr.mxu0 0.0
    %85 = vmatpush1.xpose.msra.mxu0 %v82
    %86 = vmatprep.subr.mxu0 0.0
    %87 = vmatpush1.xpose.msra.mxu0 0.0
    %88 = vmatprep.subr.mxu0 0.0
    %89 = vmatpush1.xpose.msra.mxu0 0.0
    %90 = vmatprep.subr.mxu0 0.0
    %91 = vmatpush1.xpose.msra.mxu0 0.0
    %92 = vmatprep.subr.mxu0 0.0
    %93 = vmatpush1.xpose.msra.mxu0 0.0
    %94 = vmatprep.subr.mxu0 0.0
    %95 = vmatpush1.xpose.msra.mxu0 0.0
    %96 = vmatprep.subr.mxu0 0.0
    %97 = vmatpush1.xpose.msra.mxu0 0.0
    %98 = vmatprep.subr.mxu0 0.0
    %99 = vmatpush1.xpose.msra.mxu0 0.0
    %100 = vmatprep.subr.mxu0 0.0
    %101 = vmatpush1.xpose.msra.mxu0 0.0
    %102 = vmatprep.subr.mxu0 0.0
    %103 = vmatpush1.xpose.msra.mxu0 0.0
    %104 = vmatprep.subr.mxu0 0.0
    %105 = vmatpush1.xpose.msra.mxu0 0.0
    %106 = vmatprep.subr.mxu0 0.0
    %107 = vmatpush1.xpose.msra.mxu0 0.0
    %108 = vmatprep.subr.mxu0 0.0
    %109 = vmatpush1.xpose.msra.mxu0 0.0
    %110 = vmatprep.subr.mxu0 0.0
    %111 = vmatpush1.xpose.msra.mxu0 0.0
    %112 = vmatprep.subr.mxu0 0.0
    %113 = vmatpush1.xpose.msra.mxu0 0.0
    %114 = vmatprep.subr.mxu0 0.0
    %115 = vmatpush1.xpose.msra.mxu0 0.0
    %116 = vmatprep.subr.mxu0 0.0
    %117 = vmatpush1.xpose.msra.mxu0 0.0
    %118 = vmatprep.subr.mxu0 0.0
    %119 = vmatpush1.xpose.msra.mxu0 0.0
    %120 = vmatprep.subr.mxu0 0.0
    %121 = vmatpush1.xpose.msra.mxu0 0.0
    %122 = vmatprep.subr.mxu0 0.0
    %123 = vmatpush1.xpose.msra.mxu0 0.0
    %124 = vmatprep.subr.mxu0 0.0
    %125 = vmatpush1.xpose.msra.mxu0 0.0
    %126 = vmatprep.subr.mxu0 0.0
    %127 = vmatpush1.xpose.msra.mxu0 0.0
    %128 = vmatprep.subr.mxu0 0.0
    %129 = vmatpush1.xpose.msra.mxu0 0.0
    %130 = vmatprep.subr.mxu0 0.0
    %131 = vmatpush1.xpose.msra.mxu0 0.0
    %132 = vmatprep.subr.mxu0 0.0
    %133 = vmatpush1.xpose.msra.mxu0 0.0
    %134 = vmatprep.subr.mxu0 0.0
    %135 = vmatpush1.xpose.msra.mxu0 0.0
    %136 = vmatprep.subr.mxu0 0.0
    %137 = vmatpush1.xpose.msra.mxu0 0.0
    %138 = vmatprep.subr.mxu0 0.0
    %139 = vmatpush1.xpose.msra.mxu0 0.0
    %140 = vmatprep.subr.mxu0 0.0
    %141 = vmatpush1.xpose.msra.mxu0 0.0
    %142 = vmatprep.subr.mxu0 0.0
    %143 = vmatpush1.xpose.msra.mxu0 0.0
    %144 = vmatprep.subr.mxu0 0.0
    %145 = vmatpush1.xpose.msra.mxu0 0.0
    %146 = vmatprep.subr.mxu0 0.0
    %147 = vmatpush1.xpose.msra.mxu0 0.0
    %148 = vmatprep.mubr.f32.mxu0 0.0
    %149 = vmatmul.mubr.f32.gmra.mrb[0].mxu0 %v70
    %v150 = vpop.f32.mrb[0].mxu0
    %v151 = vadd.f32 %v51, %v150
    %v152 = vpop.f32.mrb[0].mxu0
    %153 = vmatprep.mubr.f32.mxu0 0.0
    %154 = vmatmul.mubr.f32.gmra.mrb[0].mxu0 %v73
    %v155 = vpop.f32.mrb[0].mxu0
    %v156 = vadd.f32 %v56, %v155
    %v157 = vpop.f32.mrb[0].mxu0
    %158 = vmatprep.mubr.f32.mxu0 0.0
    %159 = vmatmul.mubr.f32.gmra.mrb[0].mxu0 %v76
    %v160 = vpop.f32.mrb[0].mxu0
    %v161 = vadd.f32 %v61, %v160
    %v162 = vpop.f32.mrb[0].mxu0
    %163 = vmatprep.mubr.f32.mxu0 0.0
    %164 = vmatmul.mubr.f32.gmra.mrb[0].mxu0 %v79
    %v165 = vpop.f32.mrb[0].mxu0
    %v166 = vadd.f32 %v66, %v165
    %v167 = vpop.f32.mrb[0].mxu0
    %168 = vdwg.mxu0
    %v169 = vtanh.pop %v151
    %v170 = vtanh.pop %v156
    %v171 = vtanh.pop %v161
    %v172 = vtanh.pop %v166
    %174 = vset.pattern.permute.xlu0 0
    %175 = vperm.xlu0 %174, %v42
    %v176 = vpop.permute.xlu0 %175
    %179 = vset.pattern.permute.xlu0 0
    %180 = vperm.xlu0 %179, %v43
    %v181 = vpop.permute.xlu0 %180
    %184 = vset.pattern.permute.xlu0 0
    %185 = vperm.xlu0 %184, %v44
    %v186 = vpop.permute.xlu0 %185
    %189 = vset.pattern.permute.xlu0 0
    %190 = vperm.xlu0 %189, %v45
    %v191 = vpop.permute.xlu0 %190
    %v193 = vmul.f32 %v169, %v176
    %v194 = vmul.f32 %v170, %v181
    %v195 = vmul.f32 %v171, %v186
    %v196 = vmul.f32 %v172, %v191
    %vm197 = vcmask 64512
    %v198 = vsel %vm197, %v193, 0.0
    %v199 = vsel %vm197, %v194, 0.0
    %v200 = vadd.f32 %v198, %v199
    %v201 = vsel %vm197, %v195, 0.0
    %v202 = vadd.f32 %v200, %v201
    %v203 = vsel %vm197, %v196, 0.0
    %v204 = vadd.f32 %v202, %v203
    %v205 = vrot.slane %v204, 4
    %v206 = vadd.f32 %v204, %v205
    %v207 = vrot.slane %v206, 2
    %v208 = vadd.f32 %v206, %v207
    %v209 = vrot.slane %v208, 1
    %v210 = vadd.f32 %v208, %v209
    %v211 = vstv %s46
    %v212 = vadd.f32 %v210, %v211
    %v213 = vmul.f32 %v212, 0.5
    %v214 = vtanh.pop %v213
    %v215 = vadd.f32 %v214, 1.0
    %v216 = vmul.f32 %v215, 0.5
    %vm217 = vcmask 57344
    %218 = vst.msk [vmem:[#allocation3] sm:$0x1] %vm217, %v216
    // Predicated region
    $region22: #{tpu_custom_call.1} parent=1 // pred_check
      _
    $region23: #{tpu_custom_call.1} parent=1 // pred_check_branch
      %220 = sbr.rel (0) target = $region25
    $region24: #{tpu_custom_call.1} parent=1 // pred_region
      %s222 = ssub.s32 16, 16
      %223 = vsyncadd [#allocation4], %s222
      %s224 = smul.addr %s9, 16
      %s225 = scalar_lea.hbm %s5, %s224
      %s227 = sshll.u32 [#allocation3], 4
      %s228 = int_to_ptr.vmem [resolvable:$true] %s227
      %230 = dma.vmem_to_hbm [thread:$0]  %s228, 16, %s225, [#allocation4]
    $region25: #{tpu_custom_call.1} parent=1 // pred_fallthru
      _
    // Predicated region
    $region26: #{tpu_custom_call.1} parent=1 // pred_check
      _
    $region27: #{tpu_custom_call.1} parent=1 // pred_check_branch
      %232 = sbr.rel (0) target = $region29
    $region28: #{tpu_custom_call.1} parent=1 // pred_region
      %233 = dma.done [#allocation4], 16
    $region29: #{tpu_custom_call.1} parent=1 // pred_fallthru
      _
    %234 = vsyncpa [#allocation4], 1

// kernel: tpu_custom_call.1
$region0: #{tpu_custom_call.1}
  #allocation0 [shape = 'u32[]', space=smem, size = 0x4, offset = 0x4, fixed_abs, tag = 'smem constant byte address 0x4 - core index']
  #allocation1 [shape = 'u32[144,128]{1,0:T(1,128)}', space=vmem, size = 0x12000, scoped, tag = 'internal scratch']
  #allocation2 [shape = 'f32[1]{0:T(128)S(6)}', space=smem, size = 0x200, scoped, tag = 'scoped memory for tpu_custom_call.1']
  %s0 = inlined_call_operand.vmem [shape: f32[8,16], index: 0, kind: input, shape index: {}]
  %s1 = inlined_call_operand.vmem [shape: f32[32,16], index: 1, kind: input, shape index: {}]
  %s2 = inlined_call_operand.vmem [shape: f32[32,1], index: 2, kind: input, shape index: {}]
  %s3 = inlined_call_operand.vmem [shape: f32[32,1], index: 3, kind: input, shape index: {}]
  %s4 = inlined_call_operand.<no memory space> [shape: f32[1], index: 4, kind: input, shape index: {}]
  %s5 = inlined_call_operand.hbm [shape: f32[1,8], index: 5, kind: output, shape index: {}]
  %s6 = sld [smem:[#allocation0]]
  $region30: #{tpu_custom_call.1} parent=0
    _
  %s8 = ssub.s32 1, %s6
  %s9 = scalar_select 0, %s8, %s6
  %10 = sst [smem:[#allocation2]] %s4
  $region1: #{tpu_custom_call.1} parent=0
    #allocation3 [shape = 'u8[512]{0}', space=vmem, size = 0x400, scoped, tag = 'output window, operand 0, single buffered']
    #allocation4 [shape = 's32[1]{0}', space=sflag, size = 0x4, scoped, tag = 'scoped memory for tpu_custom_call.1']
    %11 = vsyncpa [#allocation4], 0
    // Predicated region
    $region2: #{tpu_custom_call.1} parent=1 // pred_check
      _
    $region3: #{tpu_custom_call.1} parent=1 // pred_check_branch
      %13 = sbr.rel (0) target = $region5
    $region4: #{tpu_custom_call.1} parent=1 // pred_region
      _
    $region5: #{tpu_custom_call.1} parent=1 // pred_fallthru
      _
    // Predicated region
    $region6: #{tpu_custom_call.1} parent=1 // pred_check
      _
    $region7: #{tpu_custom_call.1} parent=1 // pred_check_branch
      %15 = sbr.rel (0) target = $region9
    $region8: #{tpu_custom_call.1} parent=1 // pred_region
      _
    $region9: #{tpu_custom_call.1} parent=1 // pred_fallthru
      _
    // Predicated region
    $region10: #{tpu_custom_call.1} parent=1 // pred_check
      _
    $region11: #{tpu_custom_call.1} parent=1 // pred_check_branch
      %17 = sbr.rel (0) target = $region13
    $region12: #{tpu_custom_call.1} parent=1 // pred_region
      _
    $region13: #{tpu_custom_call.1} parent=1 // pred_fallthru
      _
    // Predicated region
    $region14: #{tpu_custom_call.1} parent=1 // pred_check
      _
    $region15: #{tpu_custom_call.1} parent=1 // pred_check_branch
      %19 = sbr.rel (0) target = $region17
    $region16: #{tpu_custom_call.1} parent=1 // pred_region
      _
    $region17: #{tpu_custom_call.1} parent=1 // pred_fallthru
      _
    // Predicated region
    $region18: #{tpu_custom_call.1} parent=1 // pred_check
      _
    $region19: #{tpu_custom_call.1} parent=1 // pred_check_branch
      %21 = sbr.rel (0) target = $region21
    $region20: #{tpu_custom_call.1} parent=1 // pred_region
      _
    $region21: #{tpu_custom_call.1} parent=1 // pred_fallthru
      _
    %v22 = vld [vmem:[%s1] sm:$0xff]
    %v23 = vld [vmem:[%s1 + $0x8] sm:$0xff]
    %v24 = vld [vmem:[%s1 + $0x10] sm:$0xff]
    %v25 = vld [vmem:[%s1 + $0x18] sm:$0xff]
    %v26 = vld [vmem:[%s2] sm:$0xff]
    %v27 = vld [vmem:[%s2 + $0x8] sm:$0xff]
    %v28 = vld [vmem:[%s2 + $0x10] sm:$0xff]
    %v29 = vld [vmem:[%s2 + $0x18] sm:$0xff]
    %v30 = vld [vmem:[%s3] sm:$0xff]
    %v31 = vld [vmem:[%s3 + $0x8] sm:$0xff]
    %v32 = vld [vmem:[%s3 + $0x10] sm:$0xff]
    %v33 = vld [vmem:[%s3 + $0x18] sm:$0xff]
    %s34 = sld [smem:[#allocation2]]
    %v35 = vld [vmem:[%s0] sm:$0xff]
    %37 = vset.pattern.permute.xlu0 0
    %38 = vperm.xlu0 %37, %v26
    %v39 = vpop.permute.xlu0 %38
    %42 = vset.pattern.permute.xlu0 0
    %43 = vperm.xlu0 %42, %v27
    %v44 = vpop.permute.xlu0 %43
    %47 = vset.pattern.permute.xlu0 0
    %48 = vperm.xlu0 %47, %v28
    %v49 = vpop.permute.xlu0 %48
    %52 = vset.pattern.permute.xlu0 0
    %53 = vperm.xlu0 %52, %v29
    %v54 = vpop.permute.xlu0 %53
    %vm56 = vcmask 130048
    %v58 = vsel %vm56, %v22, 0
    %v61 = vsel %vm56, %v23, 0
    %v64 = vsel %vm56, %v24, 0
    %v67 = vsel %vm56, %v25, 0
    %v70 = vsel %vm56, %v35, 0
    %72 = vmatprep.subr.mxu0 0.0
    %73 = vmatpush1.xpose.msra.mxu0 %v70
    %74 = vmatprep.subr.mxu0 0.0
    %75 = vmatpush1.xpose.msra.mxu0 0.0
    %76 = vmatprep.subr.mxu0 0.0
    %77 = vmatpush1.xpose.msra.mxu0 0.0
    %78 = vmatprep.subr.mxu0 0.0
    %79 = vmatpush1.xpose.msra.mxu0 0.0
    %80 = vmatprep.subr.mxu0 0.0
    %81 = vmatpush1.xpose.msra.mxu0 0.0
    %82 = vmatprep.subr.mxu0 0.0
    %83 = vmatpush1.xpose.msra.mxu0 0.0
    %84 = vmatprep.subr.mxu0 0.0
    %85 = vmatpush1.xpose.msra.mxu0 0.0
    %86 = vmatprep.subr.mxu0 0.0
    %87 = vmatpush1.xpose.msra.mxu0 0.0
    %88 = vmatprep.subr.mxu0 0.0
    %89 = vmatpush1.xpose.msra.mxu0 0.0
    %90 = vmatprep.subr.mxu0 0.0
    %91 = vmatpush1.xpose.msra.mxu0 0.0
    %92 = vmatprep.subr.mxu0 0.0
    %93 = vmatpush1.xpose.msra.mxu0 0.0
    %94 = vmatprep.subr.mxu0 0.0
    %95 = vmatpush1.xpose.msra.mxu0 0.0
    %96 = vmatprep.subr.mxu0 0.0
    %97 = vmatpush1.xpose.msra.mxu0 0.0
    %98 = vmatprep.subr.mxu0 0.0
    %99 = vmatpush1.xpose.msra.mxu0 0.0
    %100 = vmatprep.subr.mxu0 0.0
    %101 = vmatpush1.xpose.msra.mxu0 0.0
    %102 = vmatprep.subr.mxu0 0.0
    %103 = vmatpush1.xpose.msra.mxu0 0.0
    %104 = vmatprep.subr.mxu0 0.0
    %105 = vmatpush1.xpose.msra.mxu0 0.0
    %106 = vmatprep.subr.mxu0 0.0
    %107 = vmatpush1.xpose.msra.mxu0 0.0
    %108 = vmatprep.subr.mxu0 0.0
    %109 = vmatpush1.xpose.msra.mxu0 0.0
    %110 = vmatprep.subr.mxu0 0.0
    %111 = vmatpush1.xpose.msra.mxu0 0.0
    %112 = vmatprep.subr.mxu0 0.0
    %113 = vmatpush1.xpose.msra.mxu0 0.0
    %114 = vmatprep.subr.mxu0 0.0
    %115 = vmatpush1.xpose.msra.mxu0 0.0
    %116 = vmatprep.subr.mxu0 0.0
    %117 = vmatpush1.xpose.msra.mxu0 0.0
    %118 = vmatprep.subr.mxu0 0.0
    %119 = vmatpush1.xpose.msra.mxu0 0.0
    %120 = vmatprep.subr.mxu0 0.0
    %121 = vmatpush1.xpose.msra.mxu0 0.0
    %122 = vmatprep.subr.mxu0 0.0
    %123 = vmatpush1.xpose.msra.mxu0 0.0
    %124 = vmatprep.subr.mxu0 0.0
    %125 = vmatpush1.xpose.msra.mxu0 0.0
    %126 = vmatprep.subr.mxu0 0.0
    %127 = vmatpush1.xpose.msra.mxu0 0.0
    %128 = vmatprep.subr.mxu0 0.0
    %129 = vmatpush1.xpose.msra.mxu0 0.0
    %130 = vmatprep.subr.mxu0 0.0
    %131 = vmatpush1.xpose.msra.mxu0 0.0
    %132 = vmatprep.subr.mxu0 0.0
    %133 = vmatpush1.xpose.msra.mxu0 0.0
    %134 = vmatprep.subr.mxu0 0.0
    %135 = vmatpush1.xpose.msra.mxu0 0.0
    %136 = vmatprep.mubr.f32.mxu0 0.0
    %137 = vmatmul.mubr.f32.gmra.mrb[0].mxu0 %v58
    %v138 = vpop.f32.mrb[0].mxu0
    %v139 = vadd.f32 %v39, %v138
    %v140 = vpop.f32.mrb[0].mxu0
    %141 = vmatprep.mubr.f32.mxu0 0.0
    %142 = vmatmul.mubr.f32.gmra.mrb[0].mxu0 %v61
    %v143 = vpop.f32.mrb[0].mxu0
    %v144 = vadd.f32 %v44, %v143
    %v145 = vpop.f32.mrb[0].mxu0
    %146 = vmatprep.mubr.f32.mxu0 0.0
    %147 = vmatmul.mubr.f32.gmra.mrb[0].mxu0 %v64
    %v148 = vpop.f32.mrb[0].mxu0
    %v149 = vadd.f32 %v49, %v148
    %v150 = vpop.f32.mrb[0].mxu0
    %151 = vmatprep.mubr.f32.mxu0 0.0
    %152 = vmatmul.mubr.f32.gmra.mrb[0].mxu0 %v67
    %v153 = vpop.f32.mrb[0].mxu0
    %v154 = vadd.f32 %v54, %v153
    %v155 = vpop.f32.mrb[0].mxu0
    %156 = vdwg.mxu0
    %v157 = vtanh.pop %v139
    %v158 = vtanh.pop %v144
    %v159 = vtanh.pop %v149
    %v160 = vtanh.pop %v154
    %162 = vset.pattern.permute.xlu0 0
    %163 = vperm.xlu0 %162, %v30
    %v164 = vpop.permute.xlu0 %163
    %167 = vset.pattern.permute.xlu0 0
    %168 = vperm.xlu0 %167, %v31
    %v169 = vpop.permute.xlu0 %168
    %172 = vset.pattern.permute.xlu0 0
    %173 = vperm.xlu0 %172, %v32
    %v174 = vpop.permute.xlu0 %173
    %177 = vset.pattern.permute.xlu0 0
    %178 = vperm.xlu0 %177, %v33
    %v179 = vpop.permute.xlu0 %178
    %v181 = vmul.f32 %v157, %v164
    %v182 = vmul.f32 %v158, %v169
    %v183 = vmul.f32 %v159, %v174
    %v184 = vmul.f32 %v160, %v179
    %vm185 = vcmask 64512
    %v186 = vsel %vm185, %v181, 0.0
    %v187 = vsel %vm185, %v182, 0.0
    %v188 = vadd.f32 %v186, %v187
    %v189 = vsel %vm185, %v183, 0.0
    %v190 = vadd.f32 %v188, %v189
    %v191 = vsel %vm185, %v184, 0.0
    %v192 = vadd.f32 %v190, %v191
    %v193 = vrot.slane %v192, 4
    %v194 = vadd.f32 %v192, %v193
    %v195 = vrot.slane %v194, 2
    %v196 = vadd.f32 %v194, %v195
    %v197 = vrot.slane %v196, 1
    %v198 = vadd.f32 %v196, %v197
    %v199 = vstv %s34
    %v200 = vadd.f32 %v198, %v199
    %v201 = vmul.f32 %v200, 0.5
    %v202 = vtanh.pop %v201
    %v203 = vadd.f32 %v202, 1.0
    %v204 = vmul.f32 %v203, 0.5
    %vm205 = vcmask 57344
    %206 = vst.msk [vmem:[#allocation3] sm:$0x1] %vm205, %v204
    // Predicated region
    $region22: #{tpu_custom_call.1} parent=1 // pred_check
      _
    $region23: #{tpu_custom_call.1} parent=1 // pred_check_branch
      %208 = sbr.rel (0) target = $region25
    $region24: #{tpu_custom_call.1} parent=1 // pred_region
      %s210 = ssub.s32 16, 16
      %211 = vsyncadd [#allocation4], %s210
      %s213 = sshll.u32 [#allocation3], 4
      %s214 = int_to_ptr.vmem [resolvable:$true] %s213
      %216 = dma.vmem_to_hbm [thread:$0]  %s214, 16, %s5, [#allocation4]
    $region25: #{tpu_custom_call.1} parent=1 // pred_fallthru
      _
    // Predicated region
    $region26: #{tpu_custom_call.1} parent=1 // pred_check
      _
    $region27: #{tpu_custom_call.1} parent=1 // pred_check_branch
      %218 = sbr.rel (0) target = $region29
    $region28: #{tpu_custom_call.1} parent=1 // pred_region
      %219 = dma.done [#allocation4], 16
    $region29: #{tpu_custom_call.1} parent=1 // pred_fallthru
      _
    %220 = vsyncpa [#allocation4], 1

</llo_original>
